<compile_context>
chip_gen: v7x
topology: tpu7x:2x2x1
jax: 0.10.0
libtpu: 0.0.40
codegen_flags: <defaults>
</compile_context>

<pallas_src>
import jax
import jax.numpy as jnp
from jax.experimental import pallas as pl
from jax.experimental.pallas import tpu as pltpu


def _round_up(x, m):
    return ((x + m - 1) // m) * m


# ----------------------------------------------------------------------------
# Pallas kernel: fused  CLS @ W + bias -> sigmoid  on one batch tile
# ----------------------------------------------------------------------------
def event_head_kernel(cls_ref, w_ref, b_ref, out_ref):
    # cls_ref: [TB, H]  bf16   (CLS rows only; the seq dim never enters the kernel)
    # w_ref:   [H, Ep]  bf16   (fc weight, lane-padded, resident across steps)
    # b_ref:   [1, Ep]  f32
    # out_ref: [TB, Ep] bf16
    logits = jnp.dot(cls_ref[...], w_ref[...],
                     preferred_element_type=jnp.float32)      # MXU, f32 accumulation
    logits = logits + b_ref[...]                              # f32 epilogue (v5e-safe)
    out_ref[...] = jax.nn.sigmoid(logits).astype(out_ref.dtype)


# ----------------------------------------------------------------------------
# One-time parameter preprocessing (hoisted out of the per-call hot path)
# ----------------------------------------------------------------------------
def prepare_fc_params(w, b):
    """w: [H, E] f32, b: [E] f32 -> (w_bf16 [H, Ep], b_f32 [1, Ep]); Ep multiple of 128."""
    H, E = w.shape
    Ep = _round_up(max(E, 128), 128)                          # lane-dense output width
    w_bf = jnp.pad(w.astype(jnp.bfloat16), ((0, 0), (0, Ep - E)))
    b_pad = jnp.pad(b.astype(jnp.float32), (0, Ep - E)).reshape(1, Ep)
    return w_bf, b_pad


# ----------------------------------------------------------------------------
# Head wrapper: CLS extraction + fused Linear/sigmoid Pallas kernel
# ----------------------------------------------------------------------------
def event_detection_head(hidden_state, w_bf, b_pad, num_event, *, block_b=512):
    """hidden_state: [B, S, H] f32 -> sigmoid(cls @ W + b): [B, num_event] f32."""
    B, S, H = hidden_state.shape
    Ep = w_bf.shape[1]

    # CLS slice + bf16 cast fuse into a single strided-read XLA op; only B*H
    # elements of the [B, S, H] hidden state are ever read for the head.
    # TODO(synk): DMA the CLS rows straight out of the [B,S,H] tensor with a
    # squeezed-seq BlockSpec to also skip this B*H bf16 intermediate write.
    cls_bf = hidden_state[:, 0, :].astype(jnp.bfloat16)

    # Batch tile: multiple of 16 (bf16 sublane packing).  For B > 16 cap the
    # tile at ceil(B/2) so there are always >= 2 grid steps and v7x's two
    # TensorCores can split the (parallel) batch axis.
    if B <= 16:
        tb = _round_up(max(B, 1), 16)
    else:
        tb = min(block_b, _round_up(pl.cdiv(B, 2), 16))
    bp = _round_up(B, tb)
    if bp != B:                                 # no-op whenever tb divides B
        cls_bf = jnp.pad(cls_bf, ((0, bp - B), (0, 0)))

    out = pl.pallas_call(
        event_head_kernel,
        out_shape=jax.ShapeDtypeStruct((bp, Ep), jnp.bfloat16),
        grid=(bp // tb,),
        in_specs=[
            pl.BlockSpec((tb, H), lambda i: (i, 0)),    # CLS batch tile (pipelined)
            pl.BlockSpec((H, Ep), lambda i: (0, 0)),    # weight, resident across steps
            pl.BlockSpec((1, Ep), lambda i: (0, 0)),    # bias, resident
        ],
        out_specs=pl.BlockSpec((tb, Ep), lambda i: (i, 0)),
        compiler_params=pltpu.CompilerParams(
            dimension_semantics=("parallel",)),          # megacore-splittable batch
    )(cls_bf, w_bf, b_pad)

    # Drop batch/lane padding, upcast the bf16 logits back to f32.
    return out[:B, :num_event].astype(jnp.float32)


# ----------------------------------------------------------------------------
# Synthetic stand-in encoder (plain JAX glue; the real encoder is external).
# ----------------------------------------------------------------------------
# TODO(synk): the real `encoder` (e.g. a HuggingFace BERT) is an external
# module and is not re-implemented here; this deterministic stand-in only
# produces a [B, S, H] hidden state with the same interface.
def synthetic_encoder(input_ids, segment_ids, attn_masks, params):
    h = (params["tok_emb"][input_ids]
         + params["seg_emb"][segment_ids]
         + params["pos_emb"][None, : input_ids.shape[1], :])
    h = h * attn_masks[..., None].astype(h.dtype)
    h = jnp.tanh(h @ params["enc_w"] + params["enc_b"])
    return h  # [B, S, H]


# ----------------------------------------------------------------------------
# Full forward pass, mirroring EventDetection.forward
# ----------------------------------------------------------------------------
def event_detection_forward(input_ids, segment_ids, attn_masks, params, fc_w_bf, fc_b_pad):
    hidden_state = synthetic_encoder(input_ids, segment_ids, attn_masks, params)
    num_event = params["fc_b"].shape[0]
    return event_detection_head(hidden_state, fc_w_bf, fc_b_pad, num_event)


if __name__ == "__main__":
    # Small shapes: batch=2, seq=8, hidden(input_size)=32, num_event=4.
    # (At these toy shapes pallas_call fixed overhead dominates; the tiling
    #  above is what matters at production B/H/E.)
    B, S, H, E = 2, 8, 32, 4
    VOCAB, TYPES = 50, 2

    key = jax.random.PRNGKey(0)
    ks = jax.random.split(key, 8)

    params = {
        "tok_emb": jax.random.normal(ks[0], (VOCAB, H), jnp.float32) * 0.02,
        "seg_emb": jax.random.normal(ks[1], (TYPES, H), jnp.float32) * 0.02,
        "pos_emb": jax.random.normal(ks[2], (S, H), jnp.float32) * 0.02,
        "enc_w":   jax.random.normal(ks[3], (H, H), jnp.float32) * (1.0 / jnp.sqrt(H)),
        "enc_b":   jnp.zeros((H,), jnp.float32),
        # nn.Linear(input_size, num_event): torch weight [E, H] -> stored [H, E]
        "fc_w":    jax.random.normal(ks[4], (H, E), jnp.float32) * (1.0 / jnp.sqrt(H)),
        "fc_b":    jax.random.normal(ks[5], (E,), jnp.float32) * 0.01,
    }

    # One-time fc parameter prep (bf16 cast + lane pad) — hoisted off the hot path.
    fc_w_bf, fc_b_pad = prepare_fc_params(params["fc_w"], params["fc_b"])
    jax.block_until_ready((fc_w_bf, fc_b_pad))

    input_ids   = jax.random.randint(ks[6], (B, S), 0, VOCAB, dtype=jnp.int32)
    segment_ids = jnp.zeros((B, S), jnp.int32)
    attn_masks  = jnp.ones((B, S), jnp.int32)

    logits = event_detection_forward(input_ids, segment_ids, attn_masks,
                                     params, fc_w_bf, fc_b_pad)
    jax.block_until_ready(logits)
    assert logits.shape == (B, E)
    assert logits.dtype == jnp.float32

    # Pure-JAX reference with the same bf16 rounding of the matmul inputs.
    # Kernel stores logits as bf16, so allow ~one bf16 ulp on values in (0, 1).
    hidden = synthetic_encoder(input_ids, segment_ids, attn_masks, params)
    cls_r = hidden[:, 0, :].astype(jnp.bfloat16).astype(jnp.float32)
    w_r   = params["fc_w"].astype(jnp.bfloat16).astype(jnp.float32)
    ref = jax.nn.sigmoid(
        jnp.dot(cls_r, w_r, precision=jax.lax.Precision.HIGHEST) + params["fc_b"])
    assert jnp.allclose(logits, ref, atol=5e-3, rtol=0.0)

    print("KERNEL_OK")
</pallas_src>

<mosaic_0001>
module attributes {stable_mosaic.version = 11 : i64} {
  func.func @event_head_kernel(%arg0: i32, %arg1: memref<16x32xbf16, #tpu.memory_space<vmem>>, %arg2: memref<32x128xbf16, #tpu.memory_space<vmem>>, %arg3: memref<1x128xf32, #tpu.memory_space<vmem>>, %arg4: memref<16x128xbf16, #tpu.memory_space<vmem>>) attributes {dimension_semantics = [#tpu.dimension_semantics<parallel>], iteration_bounds = array<i64: 1>, scalar_prefetch = 0 : i64, scratch_operands = 0 : i64, tpu.core_type = #tpu.core_type<tc>, window_params = [{transform_indices = @transform_0, window_bounds = array<i64: 16, 32>}, {pipeline_mode = #tpu.pipeline_mode<synchronous>, transform_indices = @transform_1, window_bounds = array<i64: 32, 128>}, {pipeline_mode = #tpu.pipeline_mode<synchronous>, transform_indices = @transform_2, window_bounds = array<i64: 1, 128>}, {transform_indices = @transform_3, window_bounds = array<i64: 16, 128>}]} {
    %c0 = arith.constant 0 : index
    %c0_0 = arith.constant 0 : index
    %0 = vector.load %arg1[%c0, %c0_0] : memref<16x32xbf16, #tpu.memory_space<vmem>>, vector<16x32xbf16>
    %c0_1 = arith.constant 0 : index
    %c0_2 = arith.constant 0 : index
    %1 = vector.load %arg2[%c0_1, %c0_2] : memref<32x128xbf16, #tpu.memory_space<vmem>>, vector<32x128xbf16>
    %cst = arith.constant dense<0.000000e+00> : vector<16x128xf32>
    %2 = tpu.matmul %0, %1, %cst {dimension_numbers = #tpu.dot_dimension_numbers<[1], [0], [0], [1], [0, 0, 1, 1], [], []>} : vector<16x32xbf16>, vector<32x128xbf16>, vector<16x128xf32> -> vector<16x128xf32>
    %c0_3 = arith.constant 0 : index
    %c0_4 = arith.constant 0 : index
    %3 = vector.load %arg3[%c0_3, %c0_4] : memref<1x128xf32, #tpu.memory_space<vmem>>, vector<1x128xf32>
    %4 = vector.broadcast %3 : vector<1x128xf32> to vector<16x128xf32>
    %5 = arith.addf %2, %4 : vector<16x128xf32>
    %6 = arith.negf %5 : vector<16x128xf32>
    %7 = math.exp %6 : vector<16x128xf32>
    %cst_5 = arith.constant 1.000000e+00 : f32
    %8 = vector.broadcast %cst_5 : f32 to vector<16x128xf32>
    %9 = arith.addf %8, %7 : vector<16x128xf32>
    %10 = arith.divf %8, %9 : vector<16x128xf32>
    %11 = arith.truncf %10 : vector<16x128xf32> to vector<16x128xbf16>
    %c0_6 = arith.constant 0 : index
    %c0_7 = arith.constant 0 : index
    %12 = vector.load %arg4[%c0_6, %c0_7] : memref<16x128xbf16, #tpu.memory_space<vmem>>, vector<16x128xbf16>
    tpu.vector_store %arg4[%c0_6, %c0_7], %11 {strides = array<i32>} : memref<16x128xbf16, #tpu.memory_space<vmem>>, vector<16x128xbf16>,
    return
  }
  func.func @transform_0(%arg0: i32) -> (i32, i32) {
    %c0_i32 = arith.constant 0 : i32
    %c0_i32_0 = arith.constant 0 : i32
    return %arg0, %c0_i32 : i32, i32
  }
  func.func @transform_1(%arg0: i32) -> (i32, i32) {
    %c0_i32 = arith.constant 0 : i32
    %c0_i32_0 = arith.constant 0 : i32
    %c0_i32_1 = arith.constant 0 : i32
    return %c0_i32, %c0_i32_0 : i32, i32
  }
  func.func @transform_2(%arg0: i32) -> (i32, i32) {
    %c0_i32 = arith.constant 0 : i32
    %c0_i32_0 = arith.constant 0 : i32
    %c0_i32_1 = arith.constant 0 : i32
    return %c0_i32, %c0_i32_0 : i32, i32
  }
  func.func @transform_3(%arg0: i32) -> (i32, i32) {
    %c0_i32 = arith.constant 0 : i32
    %c0_i32_0 = arith.constant 0 : i32
    return %arg0, %c0_i32 : i32, i32
  }
}

</mosaic_0001>

<llo_original>
// kernel: tpu_custom_call.1
$region0: #{tpu_custom_call.1}
  #allocation0 [shape = 'u32[]', space=smem, size = 0x4, offset = 0x4, fixed_abs, tag = 'smem constant byte address 0x4 - core index']
  #allocation1 [shape = 'u32[144,128]{1,0:T(1,128)}', space=vmem, size = 0x12000, scoped, tag = 'internal scratch']
  %s0 = inlined_call_operand.hbm [shape: bf16[16,32], index: 0, kind: input, shape index: {}]
  %s1 = inlined_call_operand.hbm [shape: bf16[32,128], index: 1, kind: input, shape index: {}]
  %s2 = inlined_call_operand.vmem [shape: f32[1,128], index: 2, kind: input, shape index: {}]
  %s3 = inlined_call_operand.hbm [shape: bf16[16,128], index: 3, kind: output, shape index: {}]
  %s4 = sld [smem:[#allocation0]]
  $region30: #{tpu_custom_call.1} parent=0
    _
  %s6 = ssub.s32 1, %s4
  %s7 = scalar_select 0, %s6, %s4
  $region1: #{tpu_custom_call.1} parent=0
    #allocation2 [shape = 'u8[4096]{0}', space=vmem, size = 0x1000, scoped, tag = 'input window, operand 0, single buffered']
    #allocation3 [shape = 's32[1]{0}', space=sflag, size = 0x4, scoped, tag = 'scoped memory for tpu_custom_call.1']
    #allocation4 [shape = 's32[1]{0}', space=sflag, size = 0x4, scoped, tag = 'scoped memory for tpu_custom_call.1']
    #allocation5 [shape = 'u8[8192]{0}', space=vmem, size = 0x2000, scoped, tag = 'input window, operand 1, single buffered']
    #allocation6 [shape = 's32[1]{0}', space=sflag, size = 0x4, scoped, tag = 'scoped memory for tpu_custom_call.1']
    #allocation7 [shape = 'u8[4096]{0}', space=vmem, size = 0x1000, scoped, tag = 'output window, operand 0, single buffered']
    %8 = vsyncpa [#allocation3], 0
    %9 = vsyncpa [#allocation6], 0
    %10 = vsyncpa [#allocation4], 0
    // Predicated region
    $region2: #{tpu_custom_call.1} parent=1 // pred_check
      _
    $region3: #{tpu_custom_call.1} parent=1 // pred_check_branch
      %12 = sbr.rel (0) target = $region5
    $region4: #{tpu_custom_call.1} parent=1 // pred_region
      %s14 = ssub.s32 128, 128
      %15 = vsyncadd [#allocation3], %s14
      %s16 = sshll.u32 [#allocation2], 4
      %s17 = int_to_ptr.vmem [resolvable:$true] %s16
      %22 = dma.hbm_to_vmem [thread:$0]  %s0, 128, %s17, [#allocation3], 64, 64, 4
    $region5: #{tpu_custom_call.1} parent=1 // pred_fallthru
      _
    // Predicated region
    $region6: #{tpu_custom_call.1} parent=1 // pred_check
      _
    $region7: #{tpu_custom_call.1} parent=1 // pred_check_branch
      %24 = sbr.rel (0) target = $region9
    $region8: #{tpu_custom_call.1} parent=1 // pred_region
      %s26 = ssub.s32 256, 256
      %27 = vsyncadd [#allocation6], %s26
      %s28 = sshll.u32 [#allocation5], 4
      %s29 = int_to_ptr.vmem [resolvable:$true] %s28
      %34 = dma.hbm_to_vmem [thread:$0]  %s1, 256, %s29, [#allocation6], 64, 64, 4
    $region9: #{tpu_custom_call.1} parent=1 // pred_fallthru
      _
    // Predicated region
    $region10: #{tpu_custom_call.1} parent=1 // pred_check
      _
    $region11: #{tpu_custom_call.1} parent=1 // pred_check_branch
      %36 = sbr.rel (0) target = $region13
    $region12: #{tpu_custom_call.1} parent=1 // pred_region
      _
    $region13: #{tpu_custom_call.1} parent=1 // pred_fallthru
      _
    // Predicated region
    $region14: #{tpu_custom_call.1} parent=1 // pred_check
      _
    $region15: #{tpu_custom_call.1} parent=1 // pred_check_branch
      %38 = sbr.rel (0) target = $region17
    $region16: #{tpu_custom_call.1} parent=1 // pred_region
      %39 = dma.done [#allocation3], 128
    $region17: #{tpu_custom_call.1} parent=1 // pred_fallthru
      _
    // Predicated region
    $region18: #{tpu_custom_call.1} parent=1 // pred_check
      _
    $region19: #{tpu_custom_call.1} parent=1 // pred_check_branch
      %41 = sbr.rel (0) target = $region21
    $region20: #{tpu_custom_call.1} parent=1 // pred_region
      %42 = dma.done [#allocation6], 256
    $region21: #{tpu_custom_call.1} parent=1 // pred_fallthru
      _
    %v44 = vld [vmem:[#allocation2] sm:$0xf]
    %v45 = vld [vmem:[#allocation2 + $0x4] sm:$0xf]
    %v46 = vld [vmem:[#allocation5] sm:$0xf]
    %v47 = vld [vmem:[#allocation5 + $0x4] sm:$0xf]
    %v48 = vld [vmem:[#allocation5 + $0x8] sm:$0xf]
    %v49 = vld [vmem:[#allocation5 + $0xc] sm:$0xf]
    %v50 = vld [vmem:[%s2] sm:$0x1]
    %v52 = vlaneseq
    %v53 = vshrl.u32 %v52, 7
    %v54 = vsub.s32 0, %v53
    %v55 = vrot.slane %v50, %v54
    %v59 = vunpack.c.l.b16 %v44
    %v60 = vunpack.c.l.b16 %v45
    %v61 = vpack.c.b16 %v60, %v59
    %v66 = vunpack.c.l.b16 %v46
    %v67 = vunpack.c.l.b16 %v47
    %v68 = vunpack.c.l.b16 %v48
    %v69 = vunpack.c.l.b16 %v49
    %v70 = vpack.c.b16 %v67, %v66
    %v71 = vpack.c.b16 %v69, %v68
    %vm74 = vcmask 261120
    %v76 = vsel %vm74, %v61, 0
    %78 = vmatprep.subr.bf16.mxu0 0
    %79 = vmatpush1.bf16.msra.mxu0 %v70
    %80 = vmatprep.subr.bf16.mxu0 0
    %81 = vmatpush1.bf16.msra.mxu0 %v71
    %82 = vmatprep.subr.bf16.mxu0 0
    %83 = vmatpush1.bf16.msra.mxu0 0
    %84 = vmatprep.subr.bf16.mxu0 0
    %85 = vmatpush1.bf16.msra.mxu0 0
    %86 = vmatprep.subr.bf16.mxu0 0
    %87 = vmatpush1.bf16.msra.mxu0 0
    %88 = vmatprep.subr.bf16.mxu0 0
    %89 = vmatpush1.bf16.msra.mxu0 0
    %90 = vmatprep.subr.bf16.mxu0 0
    %91 = vmatpush1.bf16.msra.mxu0 0
    %92 = vmatprep.subr.bf16.mxu0 0
    %93 = vmatpush1.bf16.msra.mxu0 0
    %94 = vmatprep.subr.bf16.mxu0 0
    %95 = vmatpush1.bf16.msra.mxu0 0
    %96 = vmatprep.subr.bf16.mxu0 0
    %97 = vmatpush1.bf16.msra.mxu0 0
    %98 = vmatprep.subr.bf16.mxu0 0
    %99 = vmatpush1.bf16.msra.mxu0 0
    %100 = vmatprep.subr.bf16.mxu0 0
    %101 = vmatpush1.bf16.msra.mxu0 0
    %102 = vmatprep.subr.bf16.mxu0 0
    %103 = vmatpush1.bf16.msra.mxu0 0
    %104 = vmatprep.subr.bf16.mxu0 0
    %105 = vmatpush1.bf16.msra.mxu0 0
    %106 = vmatprep.subr.bf16.mxu0 0
    %107 = vmatpush1.bf16.msra.mxu0 0
    %108 = vmatprep.subr.bf16.mxu0 0
    %109 = vmatpush1.bf16.msra.mxu0 0
    %110 = vmatprep.mubr.bf16.mxu0 0
    %111 = vmatmul.mubr.bf16.gmra.mrb[0].mxu0 %v76
    %v112 = vpop.f32.mrb[0].mxu0
    %v113 = vadd.f32 %v55, %v112
    %v114 = vpop.f32.mrb[0].mxu0
    %v115 = vpop.f32.mrb[0].mxu0
    %v116 = vadd.f32 %v55, %v115
    %v117 = vpop.f32.mrb[0].mxu0
    %118 = vdwg.mxu0
    %v119 = vxor.u32 %v113, 2147483648
    %v120 = vxor.u32 %v116, 2147483648
    %v121 = vmul.f32 %v119, 1.442695
    %v122 = vpow.pop %v121
    %v123 = vmul.f32 %v120, 1.442695
    %v124 = vpow.pop %v123
    %v125 = vadd.f32 %v122, 1.0
    %v126 = vadd.f32 %v124, 1.0
    %v127 = vrcp.pop %v125
    %v128 = vmul.f32 1.0, %v127
    %v129 = vrcp.pop %v126
    %v130 = vmul.f32 1.0, %v129
    %v131 = vpack.c.bf16 %v130, %v128
    %v133 = vunpack.c.l.b16 %v131
    %v134 = vunpack.c.h.b16 %v131
    %v135 = vpack.c.b16 %v133, %v133
    %v136 = vpack.c.b16 %v134, %v134
    %139 = vst [vmem:[#allocation7] sm:$0xf] %v135
    %140 = vst [vmem:[#allocation7 + $0x4] sm:$0xf] %v136
    // Predicated region
    $region22: #{tpu_custom_call.1} parent=1 // pred_check
      _
    $region23: #{tpu_custom_call.1} parent=1 // pred_check_branch
      %142 = sbr.rel (0) target = $region25
    $region24: #{tpu_custom_call.1} parent=1 // pred_region
      %s144 = ssub.s32 128, 128
      %145 = vsyncadd [#allocation4], %s144
      %s146 = sshll.u32 [#allocation7], 4
      %s147 = int_to_ptr.vmem [resolvable:$true] %s146
      %152 = dma.vmem_to_hbm [thread:$0]  %s147, 128, %s3, [#allocation4], 64, 64, 4
    $region25: #{tpu_custom_call.1} parent=1 // pred_fallthru
      _
    // Predicated region
    $region26: #{tpu_custom_call.1} parent=1 // pred_check
      _
    $region27: #{tpu_custom_call.1} parent=1 // pred_check_branch
      %154 = sbr.rel (0) target = $region29
    $region28: #{tpu_custom_call.1} parent=1 // pred_region
      %155 = dma.done [#allocation4], 128
    $region29: #{tpu_custom_call.1} parent=1 // pred_fallthru
      _
    %156 = vsyncpa [#allocation3], 1
    %157 = vsyncpa [#allocation6], 1
    %158 = vsyncpa [#allocation4], 1

</llo_original>
